<compile_context>
chip_gen: v6e
topology: v6e:2x2x1
jax: 0.10.0
libtpu: 0.0.40
codegen_flags: <defaults>
</compile_context>

<pallas_src>
import functools

import jax
import jax.numpy as jnp
from jax import lax
from jax.experimental import pallas as pl
from jax.experimental.pallas import tpu as pltpu


def _cdiv(a, b):
    return -(-a // b)


def _round_up(x, m):
    return _cdiv(x, m) * m


def style_head_kernel(pooled_ref,
                      w1_ref, b1_ref, w2_ref, b2_ref, gamma_ref, beta_ref,
                      w3_ref, b3_ref, w4_ref, b4_ref,
                      emb_ref, logits_ref):
    pooled = pooled_ref[...]                                               # (TM, H) bf16

    # --- style_projector: Linear -> ReLU -> (Dropout=id) -> Linear -> LayerNorm
    h1 = jnp.dot(pooled, w1_ref[...],
                 preferred_element_type=jnp.float32) + b1_ref[...]         # (TM, 2E) f32
    h1 = jnp.maximum(h1, 0.0)
    z2 = jnp.dot(h1.astype(jnp.bfloat16), w2_ref[...],
                 preferred_element_type=jnp.float32) + b2_ref[...]         # (TM, E) f32
    mean = jnp.mean(z2, axis=-1, keepdims=True)
    cz = z2 - mean
    var = jnp.mean(cz * cz, axis=-1, keepdims=True)                        # two-pass variance
    emb = cz * lax.rsqrt(var + 1e-5) * gamma_ref[...] + beta_ref[...]      # (TM, E) f32
    emb_ref[...] = emb.astype(emb_ref.dtype)                               # store bf16

    # --- style_classifier: Linear -> ReLU -> (Dropout=id) -> Linear (lane-padded to 128)
    h3 = jnp.dot(emb.astype(jnp.bfloat16), w3_ref[...],
                 preferred_element_type=jnp.float32) + b3_ref[...]         # (TM, E//2)
    h3 = jnp.maximum(h3, 0.0)
    logits = jnp.dot(h3.astype(jnp.bfloat16), w4_ref[...],
                     preferred_element_type=jnp.float32) + b4_ref[...]     # (TM, C_pad)
    logits_ref[...] = logits.astype(logits_ref.dtype)                      # store bf16


def prepare_params(params, num_classes):
    """One-time parameter prep (bf16 casts, bias reshapes, lane-padding of W4/b4).

    Hoisted out of the forward so the per-call path contains no weight-side
    XLA pad/cast kernels.
    """
    bf16, f32 = jnp.bfloat16, jnp.float32
    H, E2 = params["w1"].shape
    E = params["w2"].shape[1]
    Eh = params["w3"].shape[1]
    C = num_classes
    c_pad = 128 * _cdiv(C, 128)            # lane-dense classifier output width
    w4p = jnp.zeros((Eh, c_pad), f32).at[:, :C].set(params["w4"]).astype(bf16)
    b4p = jnp.zeros((1, c_pad), f32).at[:, :C].set(params["b4"].reshape(1, C))
    return {
        "w1": params["w1"].astype(bf16),
        "b1": params["b1"].reshape(1, E2).astype(f32),
        "w2": params["w2"].astype(bf16),
        "b2": params["b2"].reshape(1, E).astype(f32),
        "gamma": params["gamma"].reshape(1, E).astype(f32),
        "beta": params["beta"].reshape(1, E).astype(f32),
        "w3": params["w3"].astype(bf16),
        "b3": params["b3"].reshape(1, Eh).astype(f32),
        "w4p": w4p,
        "b4p": b4p,
    }


@functools.partial(jax.jit, static_argnames=("num_classes", "block_m"))
def style_embedding_forward(last_hidden_state, labels, prepped, *,
                            num_classes, block_m=256):
    """Runs the Pallas head kernel. Returns a dict mirroring the PyTorch forward."""
    B, S, H = last_hidden_state.shape
    E2 = prepped["w1"].shape[1]
    E = prepped["w2"].shape[1]
    Eh = prepped["w3"].shape[1]
    C = num_classes
    c_pad = prepped["w4p"].shape[1]

    # --- batch tiling: big tiles (amortize ~0.35us/step overhead), but keep >=2
    # grid steps whenever possible so the "parallel" axis shards across v7x's 2 TCs.
    b8 = _round_up(B, 8)
    tm = min(block_m, b8)
    if b8 > 8:
        tm = min(tm, _round_up(_cdiv(b8, 2), 8))
    b_pad = _round_up(B, tm)
    nb = b_pad // tm

    f32, bf16 = jnp.float32, jnp.bfloat16

    # CLS pooling: slice + pad + bf16 cast fuse into a single XLA pass under jit;
    # the kernel only ever DMAs (b_pad, H) bf16 rows.
    pooled_bf16 = jnp.pad(last_hidden_state[:, 0, :],
                          ((0, b_pad - B), (0, 0))).astype(bf16)

    resident = lambda shape: pl.BlockSpec(shape, lambda i: (0, 0))   # weights stay in VMEM
    rowblk = lambda shape: pl.BlockSpec(shape, lambda i: (i, 0))     # batch-tiled

    emb, slab = pl.pallas_call(
        style_head_kernel,
        out_shape=(jax.ShapeDtypeStruct((b_pad, E), bf16),
                   jax.ShapeDtypeStruct((b_pad, c_pad), bf16)),
        grid_spec=pltpu.PrefetchScalarGridSpec(
            num_scalar_prefetch=0,
            grid=(nb,),
            in_specs=[
                rowblk((tm, H)),                              # pooled CLS rows (bf16)
                resident((H, E2)), resident((1, E2)),         # W1, b1
                resident((E2, E)), resident((1, E)),          # W2, b2
                resident((1, E)), resident((1, E)),           # LayerNorm gamma, beta
                resident((E, Eh)), resident((1, Eh)),         # W3, b3
                resident((Eh, c_pad)), resident((1, c_pad)),  # W4 (lane-padded), b4
            ],
            out_specs=[rowblk((tm, E)), rowblk((tm, c_pad))],
        ),
        compiler_params=pltpu.CompilerParams(
            dimension_semantics=("parallel",),
            vmem_limit_bytes=32 * 1024 * 1024,
        ),
    )(pooled_bf16,
      prepped["w1"], prepped["b1"], prepped["w2"], prepped["b2"],
      prepped["gamma"], prepped["beta"],
      prepped["w3"], prepped["b3"], prepped["w4p"], prepped["b4p"])

    # --- cross-entropy on the tiny (B, C) logits, in f32, fused by XLA.
    logits = slab[:B, :C].astype(f32)
    lse = jax.nn.logsumexp(logits, axis=-1)
    picked = jnp.take_along_axis(logits, labels.reshape(B, 1).astype(jnp.int32),
                                 axis=-1)[:, 0]
    loss = jnp.mean(lse - picked)

    return {
        "loss": loss,
        "style_embeddings": emb[:B],               # bf16 (B, E)
        "style_logits": logits,                    # f32 (B, C)
        "pooled_output": last_hidden_state[:, 0],  # f32 (B, H)
    }


def init_params(key, hidden_size, embedding_dim, num_style_classes):
    ks = jax.random.split(key, 8)
    e2, e, eh = embedding_dim * 2, embedding_dim, embedding_dim // 2
    scale = lambda fan_in: 1.0 / jnp.sqrt(fan_in)
    return {
        "w1": jax.random.normal(ks[0], (hidden_size, e2), jnp.float32) * scale(hidden_size),
        "b1": jax.random.normal(ks[1], (1, e2), jnp.float32) * 0.01,
        "w2": jax.random.normal(ks[2], (e2, e), jnp.float32) * scale(e2),
        "b2": jax.random.normal(ks[3], (1, e), jnp.float32) * 0.01,
        "gamma": jnp.ones((1, e), jnp.float32),
        "beta": jnp.zeros((1, e), jnp.float32),
        "w3": jax.random.normal(ks[4], (e, eh), jnp.float32) * scale(e),
        "b3": jax.random.normal(ks[5], (1, eh), jnp.float32) * 0.01,
        "w4": jax.random.normal(ks[6], (eh, num_style_classes), jnp.float32) * scale(eh),
        "b4": jax.random.normal(ks[7], (1, num_style_classes), jnp.float32) * 0.01,
    }


if __name__ == "__main__":
    # Small, module-consistent shapes: batch=20, seq=8, hidden=128,
    # embedding_dim=128 (projector 128->256->128, classifier 128->64->8).
    # The batch-tile logic splits B=20 into 2 grid steps (multi-tile pipelining +
    # padded-row handling exercised).
    B, S, H = 20, 8, 128
    EMB, NCLS = 128, 8

    key = jax.random.PRNGKey(0)
    k_h, k_l, k_p = jax.random.split(key, 3)

    last_hidden_state = jax.random.normal(k_h, (B, S, H), jnp.float32)
    labels = jax.random.randint(k_l, (B,), 0, NCLS, jnp.int32)
    params = init_params(k_p, H, EMB, NCLS)
    prepped = prepare_params(params, NCLS)

    out = style_embedding_forward(last_hidden_state, labels, prepped, num_classes=NCLS)
    jax.block_until_ready(out)

    # Pure-JAX reference (same bf16-matmul / f32-accumulate recipe, outside Pallas).
    bf = lambda x: x.astype(jnp.bfloat16)
    f32 = jnp.float32
    pooled = last_hidden_state[:, 0]
    h1 = jnp.maximum(jnp.dot(bf(pooled), bf(params["w1"]),
                             preferred_element_type=f32) + params["b1"], 0.0)
    z2 = jnp.dot(bf(h1), bf(params["w2"]), preferred_element_type=f32) + params["b2"]
    mu = z2.mean(-1, keepdims=True)
    va = ((z2 - mu) ** 2).mean(-1, keepdims=True)
    emb_ref = (z2 - mu) * jax.lax.rsqrt(va + 1e-5) * params["gamma"] + params["beta"]
    h3 = jnp.maximum(jnp.dot(bf(emb_ref), bf(params["w3"]),
                             preferred_element_type=f32) + params["b3"], 0.0)
    logits_ref = jnp.dot(bf(h3), bf(params["w4"]),
                         preferred_element_type=f32) + params["b4"]
    lse = jax.nn.logsumexp(logits_ref, axis=-1)
    loss_ref = jnp.mean(lse - logits_ref[jnp.arange(B), labels])

    assert jnp.allclose(out["style_embeddings"].astype(f32), emb_ref,
                        atol=2e-2, rtol=2e-2)
    assert jnp.allclose(out["style_logits"], logits_ref, atol=2e-2, rtol=2e-2)
    assert jnp.allclose(out["pooled_output"], pooled, atol=1e-6, rtol=1e-6)
    assert jnp.allclose(out["loss"], loss_ref, atol=2e-2, rtol=2e-2)

    print("KERNEL_OK")
</pallas_src>

<mosaic_0001>
module attributes {stable_mosaic.version = 11 : i64} {
  func.func @style_head_kernel(%arg0: i32, %arg1: memref<16x128xbf16, #tpu.memory_space<vmem>>, %arg2: memref<128x256xbf16, #tpu.memory_space<vmem>>, %arg3: memref<1x256xf32, #tpu.memory_space<vmem>>, %arg4: memref<256x128xbf16, #tpu.memory_space<vmem>>, %arg5: memref<1x128xf32, #tpu.memory_space<vmem>>, %arg6: memref<1x128xf32, #tpu.memory_space<vmem>>, %arg7: memref<1x128xf32, #tpu.memory_space<vmem>>, %arg8: memref<128x64xbf16, #tpu.memory_space<vmem>>, %arg9: memref<1x64xf32, #tpu.memory_space<vmem>>, %arg10: memref<64x128xbf16, #tpu.memory_space<vmem>>, %arg11: memref<1x128xf32, #tpu.memory_space<vmem>>, %arg12: memref<16x128xbf16, #tpu.memory_space<vmem>>, %arg13: memref<16x128xbf16, #tpu.memory_space<vmem>>) attributes {dimension_semantics = [#tpu.dimension_semantics<parallel>], iteration_bounds = array<i64: 2>, scalar_prefetch = 0 : i64, scratch_operands = 0 : i64, tpu.core_type = #tpu.core_type<tc>, window_params = [{transform_indices = @transform_0, window_bounds = array<i64: 16, 128>}, {pipeline_mode = #tpu.pipeline_mode<synchronous>, transform_indices = @transform_1, window_bounds = array<i64: 128, 256>}, {pipeline_mode = #tpu.pipeline_mode<synchronous>, transform_indices = @transform_2, window_bounds = array<i64: 1, 256>}, {pipeline_mode = #tpu.pipeline_mode<synchronous>, transform_indices = @transform_3, window_bounds = array<i64: 256, 128>}, {pipeline_mode = #tpu.pipeline_mode<synchronous>, transform_indices = @transform_4, window_bounds = array<i64: 1, 128>}, {pipeline_mode = #tpu.pipeline_mode<synchronous>, transform_indices = @transform_5, window_bounds = array<i64: 1, 128>}, {pipeline_mode = #tpu.pipeline_mode<synchronous>, transform_indices = @transform_6, window_bounds = array<i64: 1, 128>}, {pipeline_mode = #tpu.pipeline_mode<synchronous>, transform_indices = @transform_7, window_bounds = array<i64: 128, 64>}, {pipeline_mode = #tpu.pipeline_mode<synchronous>, transform_indices = @transform_8, window_bounds = array<i64: 1, 64>}, {pipeline_mode = #tpu.pipeline_mode<synchronous>, transform_indices = @transform_9, window_bounds = array<i64: 64, 128>}, {pipeline_mode = #tpu.pipeline_mode<synchronous>, transform_indices = @transform_10, window_bounds = array<i64: 1, 128>}, {transform_indices = @transform_11, window_bounds = array<i64: 16, 128>}, {transform_indices = @transform_12, window_bounds = array<i64: 16, 128>}]} {
    %c0 = arith.constant 0 : index
    %c0_0 = arith.constant 0 : index
    %0 = vector.load %arg1[%c0, %c0_0] : memref<16x128xbf16, #tpu.memory_space<vmem>>, vector<16x128xbf16>
    %c0_1 = arith.constant 0 : index
    %c0_2 = arith.constant 0 : index
    %1 = vector.load %arg2[%c0_1, %c0_2] : memref<128x256xbf16, #tpu.memory_space<vmem>>, vector<128x256xbf16>
    %cst = arith.constant dense<0.000000e+00> : vector<16x256xf32>
    %2 = tpu.matmul %0, %1, %cst {dimension_numbers = #tpu.dot_dimension_numbers<[1], [0], [0], [1], [0, 0, 1, 1], [], []>} : vector<16x128xbf16>, vector<128x256xbf16>, vector<16x256xf32> -> vector<16x256xf32>
    %c0_3 = arith.constant 0 : index
    %c0_4 = arith.constant 0 : index
    %3 = vector.load %arg3[%c0_3, %c0_4] : memref<1x256xf32, #tpu.memory_space<vmem>>, vector<1x256xf32>
    %4 = vector.broadcast %3 : vector<1x256xf32> to vector<16x256xf32>
    %5 = arith.addf %2, %4 : vector<16x256xf32>
    %cst_5 = arith.constant 0.000000e+00 : f32
    %6 = vector.broadcast %cst_5 : f32 to vector<16x256xf32>
    %7 = arith.maximumf %5, %6 : vector<16x256xf32>
    %8 = arith.truncf %7 : vector<16x256xf32> to vector<16x256xbf16>
    %c0_6 = arith.constant 0 : index
    %c0_7 = arith.constant 0 : index
    %9 = vector.load %arg4[%c0_6, %c0_7] : memref<256x128xbf16, #tpu.memory_space<vmem>>, vector<256x128xbf16>
    %cst_8 = arith.constant dense<0.000000e+00> : vector<16x128xf32>
    %10 = tpu.matmul %8, %9, %cst_8 {dimension_numbers = #tpu.dot_dimension_numbers<[1], [0], [0], [1], [0, 0, 1, 1], [], []>} : vector<16x256xbf16>, vector<256x128xbf16>, vector<16x128xf32> -> vector<16x128xf32>
    %c0_9 = arith.constant 0 : index
    %c0_10 = arith.constant 0 : index
    %11 = vector.load %arg5[%c0_9, %c0_10] : memref<1x128xf32, #tpu.memory_space<vmem>>, vector<1x128xf32>
    %12 = vector.broadcast %11 : vector<1x128xf32> to vector<16x128xf32>
    %13 = arith.addf %10, %12 : vector<16x128xf32>
    %cst_11 = arith.constant dense<0.000000e+00> : vector<16xf32>
    %14 = vector.multi_reduction <add>, %13, %cst_11 [1] : vector<16x128xf32> to vector<16xf32>
    %15 = vector.shape_cast %14 : vector<16xf32> to vector<16x1xf32>
    %cst_12 = arith.constant 1.280000e+02 : f32
    %16 = vector.broadcast %cst_12 : f32 to vector<16x1xf32>
    %17 = arith.divf %15, %16 : vector<16x1xf32>
    %18 = vector.broadcast %17 : vector<16x1xf32> to vector<16x128xf32>
    %19 = arith.subf %13, %18 : vector<16x128xf32>
    %20 = arith.mulf %19, %19 : vector<16x128xf32>
    %cst_13 = arith.constant dense<0.000000e+00> : vector<16xf32>
    %21 = vector.multi_reduction <add>, %20, %cst_13 [1] : vector<16x128xf32> to vector<16xf32>
    %22 = vector.shape_cast %21 : vector<16xf32> to vector<16x1xf32>
    %cst_14 = arith.constant 1.280000e+02 : f32
    %23 = vector.broadcast %cst_14 : f32 to vector<16x1xf32>
    %24 = arith.divf %22, %23 : vector<16x1xf32>
    %cst_15 = arith.constant 9.99999974E-6 : f32
    %25 = vector.broadcast %cst_15 : f32 to vector<16x1xf32>
    %26 = arith.addf %24, %25 : vector<16x1xf32>
    %27 = math.rsqrt %26 : vector<16x1xf32>
    %28 = vector.broadcast %27 : vector<16x1xf32> to vector<16x128xf32>
    %29 = arith.mulf %19, %28 : vector<16x128xf32>
    %c0_16 = arith.constant 0 : index
    %c0_17 = arith.constant 0 : index
    %30 = vector.load %arg6[%c0_16, %c0_17] : memref<1x128xf32, #tpu.memory_space<vmem>>, vector<1x128xf32>
    %31 = vector.broadcast %30 : vector<1x128xf32> to vector<16x128xf32>
    %32 = arith.mulf %29, %31 : vector<16x128xf32>
    %c0_18 = arith.constant 0 : index
    %c0_19 = arith.constant 0 : index
    %33 = vector.load %arg7[%c0_18, %c0_19] : memref<1x128xf32, #tpu.memory_space<vmem>>, vector<1x128xf32>
    %34 = vector.broadcast %33 : vector<1x128xf32> to vector<16x128xf32>
    %35 = arith.addf %32, %34 : vector<16x128xf32>
    %36 = arith.truncf %35 : vector<16x128xf32> to vector<16x128xbf16>
    %c0_20 = arith.constant 0 : index
    %c0_21 = arith.constant 0 : index
    %37 = vector.load %arg12[%c0_20, %c0_21] : memref<16x128xbf16, #tpu.memory_space<vmem>>, vector<16x128xbf16>
    tpu.vector_store %arg12[%c0_20, %c0_21], %36 {strides = array<i32>} : memref<16x128xbf16, #tpu.memory_space<vmem>>, vector<16x128xbf16>,
    %38 = arith.truncf %35 : vector<16x128xf32> to vector<16x128xbf16>
    %c0_22 = arith.constant 0 : index
    %c0_23 = arith.constant 0 : index
    %39 = vector.load %arg8[%c0_22, %c0_23] : memref<128x64xbf16, #tpu.memory_space<vmem>>, vector<128x64xbf16>
    %cst_24 = arith.constant dense<0.000000e+00> : vector<16x64xf32>
    %40 = tpu.matmul %38, %39, %cst_24 {dimension_numbers = #tpu.dot_dimension_numbers<[1], [0], [0], [1], [0, 0, 1, 1], [], []>} : vector<16x128xbf16>, vector<128x64xbf16>, vector<16x64xf32> -> vector<16x64xf32>
    %c0_25 = arith.constant 0 : index
    %c0_26 = arith.constant 0 : index
    %41 = vector.load %arg9[%c0_25, %c0_26] : memref<1x64xf32, #tpu.memory_space<vmem>>, vector<1x64xf32>
    %42 = vector.broadcast %41 : vector<1x64xf32> to vector<16x64xf32>
    %43 = arith.addf %40, %42 : vector<16x64xf32>
    %cst_27 = arith.constant 0.000000e+00 : f32
    %44 = vector.broadcast %cst_27 : f32 to vector<16x64xf32>
    %45 = arith.maximumf %43, %44 : vector<16x64xf32>
    %46 = arith.truncf %45 : vector<16x64xf32> to vector<16x64xbf16>
    %c0_28 = arith.constant 0 : index
    %c0_29 = arith.constant 0 : index
    %47 = vector.load %arg10[%c0_28, %c0_29] : memref<64x128xbf16, #tpu.memory_space<vmem>>, vector<64x128xbf16>
    %cst_30 = arith.constant dense<0.000000e+00> : vector<16x128xf32>
    %48 = tpu.matmul %46, %47, %cst_30 {dimension_numbers = #tpu.dot_dimension_numbers<[1], [0], [0], [1], [0, 0, 1, 1], [], []>} : vector<16x64xbf16>, vector<64x128xbf16>, vector<16x128xf32> -> vector<16x128xf32>
    %c0_31 = arith.constant 0 : index
    %c0_32 = arith.constant 0 : index
    %49 = vector.load %arg11[%c0_31, %c0_32] : memref<1x128xf32, #tpu.memory_space<vmem>>, vector<1x128xf32>
    %50 = vector.broadcast %49 : vector<1x128xf32> to vector<16x128xf32>
    %51 = arith.addf %48, %50 : vector<16x128xf32>
    %52 = arith.truncf %51 : vector<16x128xf32> to vector<16x128xbf16>
    %c0_33 = arith.constant 0 : index
    %c0_34 = arith.constant 0 : index
    %53 = vector.load %arg13[%c0_33, %c0_34] : memref<16x128xbf16, #tpu.memory_space<vmem>>, vector<16x128xbf16>
    tpu.vector_store %arg13[%c0_33, %c0_34], %52 {strides = array<i32>} : memref<16x128xbf16, #tpu.memory_space<vmem>>, vector<16x128xbf16>,
    return
  }
  func.func @transform_0(%arg0: i32) -> (i32, i32) {
    %c0_i32 = arith.constant 0 : i32
    %c0_i32_0 = arith.constant 0 : i32
    return %arg0, %c0_i32 : i32, i32
  }
  func.func @transform_1(%arg0: i32) -> (i32, i32) {
    %c0_i32 = arith.constant 0 : i32
    %c0_i32_0 = arith.constant 0 : i32
    %c0_i32_1 = arith.constant 0 : i32
    return %c0_i32, %c0_i32_0 : i32, i32
  }
  func.func @transform_2(%arg0: i32) -> (i32, i32) {
    %c0_i32 = arith.constant 0 : i32
    %c0_i32_0 = arith.constant 0 : i32
    %c0_i32_1 = arith.constant 0 : i32
    return %c0_i32, %c0_i32_0 : i32, i32
  }
  func.func @transform_3(%arg0: i32) -> (i32, i32) {
    %c0_i32 = arith.constant 0 : i32
    %c0_i32_0 = arith.constant 0 : i32
    %c0_i32_1 = arith.constant 0 : i32
    return %c0_i32, %c0_i32_0 : i32, i32
  }
  func.func @transform_4(%arg0: i32) -> (i32, i32) {
    %c0_i32 = arith.constant 0 : i32
    %c0_i32_0 = arith.constant 0 : i32
    %c0_i32_1 = arith.constant 0 : i32
    return %c0_i32, %c0_i32_0 : i32, i32
  }
  func.func @transform_5(%arg0: i32) -> (i32, i32) {
    %c0_i32 = arith.constant 0 : i32
    %c0_i32_0 = arith.constant 0 : i32
    %c0_i32_1 = arith.constant 0 : i32
    return %c0_i32, %c0_i32_0 : i32, i32
  }
  func.func @transform_6(%arg0: i32) -> (i32, i32) {
    %c0_i32 = arith.constant 0 : i32
    %c0_i32_0 = arith.constant 0 : i32
    %c0_i32_1 = arith.constant 0 : i32
    return %c0_i32, %c0_i32_0 : i32, i32
  }
  func.func @transform_7(%arg0: i32) -> (i32, i32) {
    %c0_i32 = arith.constant 0 : i32
    %c0_i32_0 = arith.constant 0 : i32
    %c0_i32_1 = arith.constant 0 : i32
    return %c0_i32, %c0_i32_0 : i32, i32
  }
  func.func @transform_8(%arg0: i32) -> (i32, i32) {
    %c0_i32 = arith.constant 0 : i32
    %c0_i32_0 = arith.constant 0 : i32
    %c0_i32_1 = arith.constant 0 : i32
    return %c0_i32, %c0_i32_0 : i32, i32
  }
  func.func @transform_9(%arg0: i32) -> (i32, i32) {
    %c0_i32 = arith.constant 0 : i32
    %c0_i32_0 = arith.constant 0 : i32
    %c0_i32_1 = arith.constant 0 : i32
    return %c0_i32, %c0_i32_0 : i32, i32
  }
  func.func @transform_10(%arg0: i32) -> (i32, i32) {
    %c0_i32 = arith.constant 0 : i32
    %c0_i32_0 = arith.constant 0 : i32
    %c0_i32_1 = arith.constant 0 : i32
    return %c0_i32, %c0_i32_0 : i32, i32
  }
  func.func @transform_11(%arg0: i32) -> (i32, i32) {
    %c0_i32 = arith.constant 0 : i32
    %c0_i32_0 = arith.constant 0 : i32
    return %arg0, %c0_i32 : i32, i32
  }
  func.func @transform_12(%arg0: i32) -> (i32, i32) {
    %c0_i32 = arith.constant 0 : i32
    %c0_i32_0 = arith.constant 0 : i32
    return %arg0, %c0_i32 : i32, i32
  }
}

</mosaic_0001>

<llo_original>
// kernel: style_embedding_forward.1
$region0: #{style_embedding_forward.1}
  #allocation0 [shape = 'u32[]', space=smem, size = 0x4, offset = 0x4, fixed_abs, tag = 'smem constant byte address 0x4 - core index']
  #allocation1 [shape = 'u32[144,128]{1,0:T(1,128)}', space=vmem, size = 0x12000, scoped, tag = 'internal scratch']
  %s0 = inlined_call_operand.vmem [shape: bf16[32,128], index: 0, kind: input, shape index: {}]
  %s1 = inlined_call_operand.vmem [shape: bf16[128,256], index: 1, kind: input, shape index: {}]
  %s2 = inlined_call_operand.vmem [shape: f32[1,256], index: 2, kind: input, shape index: {}]
  %s3 = inlined_call_operand.hbm [shape: bf16[256,128], index: 3, kind: input, shape index: {}]
  %s4 = inlined_call_operand.vmem [shape: f32[1,128], index: 4, kind: input, shape index: {}]
  %s5 = inlined_call_operand.vmem [shape: f32[1,128], index: 5, kind: input, shape index: {}]
  %s6 = inlined_call_operand.vmem [shape: f32[1,128], index: 6, kind: input, shape index: {}]
  %s7 = inlined_call_operand.vmem [shape: bf16[128,64], index: 7, kind: input, shape index: {}]
  %s8 = inlined_call_operand.vmem [shape: f32[1,64], index: 8, kind: input, shape index: {}]
  %s9 = inlined_call_operand.vmem [shape: bf16[64,128], index: 9, kind: input, shape index: {}]
  %s10 = inlined_call_operand.vmem [shape: f32[1,128], index: 10, kind: input, shape index: {}]
  %s11 = inlined_call_operand.vmem [shape: bf16[32,128], index: 11, kind: output, shape index: {0}]
  %s12 = inlined_call_operand.vmem [shape: bf16[32,128], index: 12, kind: output, shape index: {1}]
  %13 = xla_tuple %s11, %s12
  %s14 = sld [smem:[#allocation0]]
  $region89: #{style_embedding_forward.1} parent=0
    _
  %s16 = ssub.s32 1, %s14
  %s17 = scalar_select 0, %s16, %s14
  $region1: #{style_embedding_forward.1} parent=0
    #allocation2 [shape = 'u8[65536]{0}', space=vmem, size = 0x10000, scoped, tag = 'input window, operand 3, single buffered']
    #allocation3 [shape = 's32[2]{0}', space=sflag, size = 0x8, scoped, tag = 'scoped memory for style_embedding_forward.1']
    %18 = vsyncpa [#allocation3], 0
    loop: start=0, step=1, limit=4
    $region2: #{style_embedding_forward.1} parent=1 // loop_pre_header
      _
    $region3: #{style_embedding_forward.1} parent=1 // loop_header
      %s20 = sphi 0, %s24
      %p21 = scmp.ge.s32.totalorder %s20, 4
      %s30 = sphi 0, %s32
      %s33 = sphi 0, %s30
      %s34 = sphi 0, %s33
      %s50 = sphi 0, %s34
      %s54 = sphi 0, %s54
      %s56 = sphi 0, %s54
      %s57 = sphi 0, %s56
      %s71 = sphi 0, %s57
      %s75 = sphi 0, %s75
      %s77 = sphi 0, %s75
      %s78 = sphi 0, %s77
      %s92 = sphi 0, %s78
      %s96 = sphi 0, %s96
      %s98 = sphi 0, %s96
      %s99 = sphi 0, %s98
      %s113 = sphi 0, %s99
      %s117 = sphi 0, %s117
      %s119 = sphi 0, %s117
      %s120 = sphi 0, %s119
      %s134 = sphi 0, %s120
      %s138 = sphi 0, %s138
      %s140 = sphi 0, %s138
      %s141 = sphi 0, %s140
      %s155 = sphi 0, %s141
      %s159 = sphi 0, %s159
      %s161 = sphi 0, %s159
      %s162 = sphi 0, %s161
      %s176 = sphi 0, %s162
      %s180 = sphi 0, %s180
      %s182 = sphi 0, %s180
      %s183 = sphi 0, %s182
      %s197 = sphi 0, %s183
      %s201 = sphi 0, %s201
      %s203 = sphi 0, %s201
      %s204 = sphi 0, %s203
      %s218 = sphi 0, %s204
      %s222 = sphi 0, %s222
      %s224 = sphi 0, %s222
      %s225 = sphi 0, %s224
      %s239 = sphi 0, %s225
      %s243 = sphi 0, %s243
      %s245 = sphi 0, %s243
      %s246 = sphi 0, %s245
      %s260 = sphi 0, %s246
      %s266 = sphi 0, %s268
      %s269 = sphi 0, %s266
      %s270 = sphi 0, %s269
      %s286 = sphi 0, %s270
      %s292 = sphi 0, %s294
      %s295 = sphi 0, %s292
      %s296 = sphi 0, %s295
      %s312 = sphi 0, %s296
    $region4: #{style_embedding_forward.1} parent=1 // loop_header_branch
      %23 = sbr.rel (%p21) target = $region8
    $region5: #{style_embedding_forward.1} parent=1 // loop_body
      %s25 = ssub.s32 %s20, 1
      %s26 = ssub.s32 %s20, 2
      %s27 = sadd.s32 %s20, 1
      %s28 = ssub.s32 %s20, %s27
      %p29 = scmp.eq.s32.totalorder %s28, 0
      %s31 = sadd.s32 %s30, 1
      %s32 = scalar_select %p29, %s30, %s31
      %p35 = pneg %p29
      %p36 = scmp.eq.s32.totalorder %s20, 1
      %p37 = por %p35, %p36
      %p38 = scmp.ne.s32.totalorder %s30, %s33
      %p39 = scmp.eq.s32.totalorder %s20, 0
      %p40 = por %p38, %p39
      %p41 = scmp.ne.s32.totalorder %s30, %s33
      %p42 = scmp.eq.s32.totalorder %s25, 1
      %p43 = por %p41, %p42
      %p44 = scmp.ne.s32.totalorder %s33, %s34
      %p45 = scmp.eq.s32.totalorder %s25, 0
      %p46 = por %p44, %p45
      %p47 = scmp.ne.s32.totalorder %s33, %s34
      %p48 = scmp.eq.s32.totalorder %s26, 1
      %p49 = por %p47, %p48
      %p51 = scmp.ne.s32.totalorder %s34, %s50
      %p52 = scmp.eq.s32.totalorder %s26, 0
      %p53 = por %p51, %p52
      %s55 = sadd.s32 %s54, 1
      %p58 = scmp.eq.s32.totalorder %s20, 1
      %p59 = scmp.ne.s32.totalorder %s54, %s56
      %p60 = scmp.eq.s32.totalorder %s20, 0
      %p61 = por %p59, %p60
      %p62 = scmp.ne.s32.totalorder %s54, %s56
      %p63 = scmp.eq.s32.totalorder %s25, 1
      %p64 = por %p62, %p63
      %p65 = scmp.ne.s32.totalorder %s56, %s57
      %p66 = scmp.eq.s32.totalorder %s25, 0
      %p67 = por %p65, %p66
      %p68 = scmp.ne.s32.totalorder %s56, %s57
      %p69 = scmp.eq.s32.totalorder %s26, 1
      %p70 = por %p68, %p69
      %p72 = scmp.ne.s32.totalorder %s57, %s71
      %p73 = scmp.eq.s32.totalorder %s26, 0
      %p74 = por %p72, %p73
      %s76 = sadd.s32 %s75, 1
      %p79 = scmp.eq.s32.totalorder %s20, 1
      %p80 = scmp.ne.s32.totalorder %s75, %s77
      %p81 = scmp.eq.s32.totalorder %s20, 0
      %p82 = por %p80, %p81
      %p83 = scmp.ne.s32.totalorder %s75, %s77
      %p84 = scmp.eq.s32.totalorder %s25, 1
      %p85 = por %p83, %p84
      %p86 = scmp.ne.s32.totalorder %s77, %s78
      %p87 = scmp.eq.s32.totalorder %s25, 0
      %p88 = por %p86, %p87
      %p89 = scmp.ne.s32.totalorder %s77, %s78
      %p90 = scmp.eq.s32.totalorder %s26, 1
      %p91 = por %p89, %p90
      %p93 = scmp.ne.s32.totalorder %s78, %s92
      %p94 = scmp.eq.s32.totalorder %s26, 0
      %p95 = por %p93, %p94
      %s97 = sadd.s32 %s96, 1
      %p100 = scmp.eq.s32.totalorder %s20, 1
      %p101 = scmp.ne.s32.totalorder %s96, %s98
      %p102 = scmp.eq.s32.totalorder %s20, 0
      %p103 = por %p101, %p102
      %p104 = scmp.ne.s32.totalorder %s96, %s98
      %p105 = scmp.eq.s32.totalorder %s25, 1
      %p106 = por %p104, %p105
      %p107 = scmp.ne.s32.totalorder %s98, %s99
      %p108 = scmp.eq.s32.totalorder %s25, 0
      %p109 = por %p107, %p108
      %p110 = scmp.ne.s32.totalorder %s98, %s99
      %p111 = scmp.eq.s32.totalorder %s26, 1
      %p112 = por %p110, %p111
      %p114 = scmp.ne.s32.totalorder %s99, %s113
      %p115 = scmp.eq.s32.totalorder %s26, 0
      %p116 = por %p114, %p115
      %s118 = sadd.s32 %s117, 1
      %p121 = scmp.eq.s32.totalorder %s20, 1
      %p122 = scmp.ne.s32.totalorder %s117, %s119
      %p123 = scmp.eq.s32.totalorder %s20, 0
      %p124 = por %p122, %p123
      %p125 = scmp.ne.s32.totalorder %s117, %s119
      %p126 = scmp.eq.s32.totalorder %s25, 1
      %p127 = por %p125, %p126
      %p128 = scmp.ne.s32.totalorder %s119, %s120
      %p129 = scmp.eq.s32.totalorder %s25, 0
      %p130 = por %p128, %p129
      %p131 = scmp.ne.s32.totalorder %s119, %s120
      %p132 = scmp.eq.s32.totalorder %s26, 1
      %p133 = por %p131, %p132
      %p135 = scmp.ne.s32.totalorder %s120, %s134
      %p136 = scmp.eq.s32.totalorder %s26, 0
      %p137 = por %p135, %p136
      %s139 = sadd.s32 %s138, 1
      %p142 = scmp.eq.s32.totalorder %s20, 1
      %p143 = scmp.ne.s32.totalorder %s138, %s140
      %p144 = scmp.eq.s32.totalorder %s20, 0
      %p145 = por %p143, %p144
      %p146 = scmp.ne.s32.totalorder %s138, %s140
      %p147 = scmp.eq.s32.totalorder %s25, 1
      %p148 = por %p146, %p147
      %p149 = scmp.ne.s32.totalorder %s140, %s141
      %p150 = scmp.eq.s32.totalorder %s25, 0
      %p151 = por %p149, %p150
      %p152 = scmp.ne.s32.totalorder %s140, %s141
      %p153 = scmp.eq.s32.totalorder %s26, 1
      %p154 = por %p152, %p153
      %p156 = scmp.ne.s32.totalorder %s141, %s155
      %p157 = scmp.eq.s32.totalorder %s26, 0
      %p158 = por %p156, %p157
      %s160 = sadd.s32 %s159, 1
      %p163 = scmp.eq.s32.totalorder %s20, 1
      %p164 = scmp.ne.s32.totalorder %s159, %s161
      %p165 = scmp.eq.s32.totalorder %s20, 0
      %p166 = por %p164, %p165
      %p167 = scmp.ne.s32.totalorder %s159, %s161
      %p168 = scmp.eq.s32.totalorder %s25, 1
      %p169 = por %p167, %p168
      %p170 = scmp.ne.s32.totalorder %s161, %s162
      %p171 = scmp.eq.s32.totalorder %s25, 0
      %p172 = por %p170, %p171
      %p173 = scmp.ne.s32.totalorder %s161, %s162
      %p174 = scmp.eq.s32.totalorder %s26, 1
      %p175 = por %p173, %p174
      %p177 = scmp.ne.s32.totalorder %s162, %s176
      %p178 = scmp.eq.s32.totalorder %s26, 0
      %p179 = por %p177, %p178
      %s181 = sadd.s32 %s180, 1
      %p184 = scmp.eq.s32.totalorder %s20, 1
      %p185 = scmp.ne.s32.totalorder %s180, %s182
      %p186 = scmp.eq.s32.totalorder %s20, 0
      %p187 = por %p185, %p186
      %p188 = scmp.ne.s32.totalorder %s180, %s182
      %p189 = scmp.eq.s32.totalorder %s25, 1
      %p190 = por %p188, %p189
      %p191 = scmp.ne.s32.totalorder %s182, %s183
      %p192 = scmp.eq.s32.totalorder %s25, 0
      %p193 = por %p191, %p192
      %p194 = scmp.ne.s32.totalorder %s182, %s183
      %p195 = scmp.eq.s32.totalorder %s26, 1
      %p196 = por %p194, %p195
      %p198 = scmp.ne.s32.totalorder %s183, %s197
      %p199 = scmp.eq.s32.totalorder %s26, 0
      %p200 = por %p198, %p199
      %s202 = sadd.s32 %s201, 1
      %p205 = scmp.eq.s32.totalorder %s20, 1
      %p206 = scmp.ne.s32.totalorder %s201, %s203
      %p207 = scmp.eq.s32.totalorder %s20, 0
      %p208 = por %p206, %p207
      %p209 = scmp.ne.s32.totalorder %s201, %s203
      %p210 = scmp.eq.s32.totalorder %s25, 1
      %p211 = por %p209, %p210
      %p212 = scmp.ne.s32.totalorder %s203, %s204
      %p213 = scmp.eq.s32.totalorder %s25, 0
      %p214 = por %p212, %p213
      %p215 = scmp.ne.s32.totalorder %s203, %s204
      %p216 = scmp.eq.s32.totalorder %s26, 1
      %p217 = por %p215, %p216
      %p219 = scmp.ne.s32.totalorder %s204, %s218
      %p220 = scmp.eq.s32.totalorder %s26, 0
      %p221 = por %p219, %p220
      %s223 = sadd.s32 %s222, 1
      %p226 = scmp.eq.s32.totalorder %s20, 1
      %p227 = scmp.ne.s32.totalorder %s222, %s224
      %p228 = scmp.eq.s32.totalorder %s20, 0
      %p229 = por %p227, %p228
      %p230 = scmp.ne.s32.totalorder %s222, %s224
      %p231 = scmp.eq.s32.totalorder %s25, 1
      %p232 = por %p230, %p231
      %p233 = scmp.ne.s32.totalorder %s224, %s225
      %p234 = scmp.eq.s32.totalorder %s25, 0
      %p235 = por %p233, %p234
      %p236 = scmp.ne.s32.totalorder %s224, %s225
      %p237 = scmp.eq.s32.totalorder %s26, 1
      %p238 = por %p236, %p237
      %p240 = scmp.ne.s32.totalorder %s225, %s239
      %p241 = scmp.eq.s32.totalorder %s26, 0
      %p242 = por %p240, %p241
      %s244 = sadd.s32 %s243, 1
      %p247 = scmp.eq.s32.totalorder %s20, 1
      %p248 = scmp.ne.s32.totalorder %s243, %s245
      %p249 = scmp.eq.s32.totalorder %s20, 0
      %p250 = por %p248, %p249
      %p251 = scmp.ne.s32.totalorder %s243, %s245
      %p252 = scmp.eq.s32.totalorder %s25, 1
      %p253 = por %p251, %p252
      %p254 = scmp.ne.s32.totalorder %s245, %s246
      %p255 = scmp.eq.s32.totalorder %s25, 0
      %p256 = por %p254, %p255
      %p257 = scmp.ne.s32.totalorder %s245, %s246
      %p258 = scmp.eq.s32.totalorder %s26, 1
      %p259 = por %p257, %p258
      %p261 = scmp.ne.s32.totalorder %s246, %s260
      %p262 = scmp.eq.s32.totalorder %s26, 0
      %p263 = por %p261, %p262
      %s264 = ssub.s32 %s20, %s27
      %p265 = scmp.eq.s32.totalorder %s264, 0
      %s267 = sadd.s32 %s266, 1
      %s268 = scalar_select %p265, %s266, %s267
      %p271 = pneg %p265
      %p272 = scmp.eq.s32.totalorder %s20, 1
      %p273 = por %p271, %p272
      %p274 = scmp.ne.s32.totalorder %s266, %s269
      %p275 = scmp.eq.s32.totalorder %s20, 0
      %p276 = por %p274, %p275
      %p277 = scmp.ne.s32.totalorder %s266, %s269
      %p278 = scmp.eq.s32.totalorder %s25, 1
      %p279 = por %p277, %p278
      %p280 = scmp.ne.s32.totalorder %s269, %s270
      %p281 = scmp.eq.s32.totalorder %s25, 0
      %p282 = por %p280, %p281
      %p283 = scmp.ne.s32.totalorder %s269, %s270
      %p284 = scmp.eq.s32.totalorder %s26, 1
      %p285 = por %p283, %p284
      %p287 = scmp.ne.s32.totalorder %s270, %s286
      %p288 = scmp.eq.s32.totalorder %s26, 0
      %p289 = por %p287, %p288
      %s290 = ssub.s32 %s20, %s27
      %p291 = scmp.eq.s32.totalorder %s290, 0
      %s293 = sadd.s32 %s292, 1
      %s294 = scalar_select %p291, %s292, %s293
      %p297 = pneg %p291
      %p298 = scmp.eq.s32.totalorder %s20, 1
      %p299 = por %p297, %p298
      %p300 = scmp.ne.s32.totalorder %s292, %s295
      %p301 = scmp.eq.s32.totalorder %s20, 0
      %p302 = por %p300, %p301
      %p303 = scmp.ne.s32.totalorder %s292, %s295
      %p304 = scmp.eq.s32.totalorder %s25, 1
      %p305 = por %p303, %p304
      %p306 = scmp.ne.s32.totalorder %s295, %s296
      %p307 = scmp.eq.s32.totalorder %s25, 0
      %p308 = por %p306, %p307
      %p309 = scmp.ne.s32.totalorder %s295, %s296
      %p310 = scmp.eq.s32.totalorder %s26, 1
      %p311 = por %p309, %p310
      %p313 = scmp.ne.s32.totalorder %s296, %s312
      %p314 = scmp.eq.s32.totalorder %s26, 0
      %p315 = por %p313, %p314
      %p316 = scmp.le.s32.totalorder 1, %s20
      %p317 = scmp.lt.s32.totalorder %s20, 3
      %p318 = pnand %p316, %p317
      %p319 = pneg %p318
      // Predicated region
      $region9: #{style_embedding_forward.1} parent=5 // pred_check
        _
      $region10: #{style_embedding_forward.1} parent=5 // pred_check_branch
        %321 = sbr.rel (%p318) target = $region12
      $region11: #{style_embedding_forward.1} parent=5 // pred_region
        %s322 = ssub.s32 %s20, 1
        // Predicated region
        $region13: #{style_embedding_forward.1} parent=11 // pred_check
          %p323 = pneg %p67
        $region14: #{style_embedding_forward.1} parent=11 // pred_check_branch
          %325 = sbr.rel (%p323) target = $region16
        $region15: #{style_embedding_forward.1} parent=11 // pred_region
          _
        $region16: #{style_embedding_forward.1} parent=11 // pred_fallthru
          _
        // Predicated region
        $region17: #{style_embedding_forward.1} parent=11 // pred_check
          %p326 = pneg %p88
        $region18: #{style_embedding_forward.1} parent=11 // pred_check_branch
          %328 = sbr.rel (%p326) target = $region20
        $region19: #{style_embedding_forward.1} parent=11 // pred_region
          _
        $region20: #{style_embedding_forward.1} parent=11 // pred_fallthru
          _
        // Predicated region
        $region21: #{style_embedding_forward.1} parent=11 // pred_check
          %p329 = pneg %p109
        $region22: #{style_embedding_forward.1} parent=11 // pred_check_branch
          %331 = sbr.rel (%p329) target = $region24
        $region23: #{style_embedding_forward.1} parent=11 // pred_region
          %s333 = ssub.s32 2048, 2048
          %334 = vsyncadd [#allocation3], %s333
          %s335 = sshll.u32 [#allocation2], 4
          %s336 = int_to_ptr.vmem [resolvable:$true] %s335
          %341 = dma.hbm_to_vmem [thread:$0]  %s3, 2048, %s336, [#allocation3], 64, 64, 4
        $region24: #{style_embedding_forward.1} parent=11 // pred_fallthru
          _
        // Predicated region
        $region25: #{style_embedding_forward.1} parent=11 // pred_check
          %p342 = pneg %p130
        $region26: #{style_embedding_forward.1} parent=11 // pred_check_branch
          %344 = sbr.rel (%p342) target = $region28
        $region27: #{style_embedding_forward.1} parent=11 // pred_region
          _
        $region28: #{style_embedding_forward.1} parent=11 // pred_fallthru
          _
        // Predicated region
        $region29: #{style_embedding_forward.1} parent=11 // pred_check
          %p345 = pneg %p151
        $region30: #{style_embedding_forward.1} parent=11 // pred_check_branch
          %347 = sbr.rel (%p345) target = $region32
        $region31: #{style_embedding_forward.1} parent=11 // pred_region
          _
        $region32: #{style_embedding_forward.1} parent=11 // pred_fallthru
          _
        // Predicated region
        $region33: #{style_embedding_forward.1} parent=11 // pred_check
          %p348 = pneg %p172
        $region34: #{style_embedding_forward.1} parent=11 // pred_check_branch
          %350 = sbr.rel (%p348) target = $region36
        $region35: #{style_embedding_forward.1} parent=11 // pred_region
          _
        $region36: #{style_embedding_forward.1} parent=11 // pred_fallthru
          _
        // Predicated region
        $region37: #{style_embedding_forward.1} parent=11 // pred_check
          %p351 = pneg %p193
        $region38: #{style_embedding_forward.1} parent=11 // pred_check_branch
          %353 = sbr.rel (%p351) target = $region40
        $region39: #{style_embedding_forward.1} parent=11 // pred_region
          _
        $region40: #{style_embedding_forward.1} parent=11 // pred_fallthru
          _
        // Predicated region
        $region41: #{style_embedding_forward.1} parent=11 // pred_check
          %p354 = pneg %p214
        $region42: #{style_embedding_forward.1} parent=11 // pred_check_branch
          %356 = sbr.rel (%p354) target = $region44
        $region43: #{style_embedding_forward.1} parent=11 // pred_region
          _
        $region44: #{style_embedding_forward.1} parent=11 // pred_fallthru
          _
        // Predicated region
        $region45: #{style_embedding_forward.1} parent=11 // pred_check
          %p357 = pneg %p235
        $region46: #{style_embedding_forward.1} parent=11 // pred_check_branch
          %359 = sbr.rel (%p357) target = $region48
        $region47: #{style_embedding_forward.1} parent=11 // pred_region
          _
        $region48: #{style_embedding_forward.1} parent=11 // pred_fallthru
          _
        // Predicated region
        $region49: #{style_embedding_forward.1} parent=11 // pred_check
          %p360 = pneg %p256
        $region50: #{style_embedding_forward.1} parent=11 // pred_check_branch
          %362 = sbr.rel (%p360) target = $region52
        $region51: #{style_embedding_forward.1} parent=11 // pred_region
          _
        $region52: #{style_embedding_forward.1} parent=11 // pred_fallthru
          _
      $region12: #{style_embedding_forward.1} parent=5 // pred_fallthru
        _
      %p363 = scmp.lt.s32.totalorder %s20, 2
      // Predicated region
      $region53: #{style_embedding_forward.1} parent=5 // pred_check
        %p364 = pneg %p363
      $region54: #{style_embedding_forward.1} parent=5 // pred_check_branch
        %366 = sbr.rel (%p364) target = $region56
      $region55: #{style_embedding_forward.1} parent=5 // pred_region
        // Predicated region
        $region57: #{style_embedding_forward.1} parent=55 // pred_check
          %p367 = pneg %p40
        $region58: #{style_embedding_forward.1} parent=55 // pred_check_branch
          %369 = sbr.rel (%p367) target = $region60
        $region59: #{style_embedding_forward.1} parent=55 // pred_region
          %s370 = smul.u32 2, %s20
          %p371 = scmp.lt.s32.totalorder %s370, 3
          %s372 = scalar_select %p371, %s370, 3
          %s373 = smul.addr %s372, 4
          %s374 = scalar_lea.vmem %s0, %s373
          %s375 = smul.u32 2, %s20
        $region60: #{style_embedding_forward.1} parent=55 // pred_fallthru
          _
      $region56: #{style_embedding_forward.1} parent=5 // pred_fallthru
        _
      %p376 = scmp.le.s32.totalorder 1, %s20
      %p377 = scmp.lt.s32.totalorder %s20, 3
      %p378 = pnand %p376, %p377
      %p379 = pneg %p378
      // Predicated region
      $region61: #{style_embedding_forward.1} parent=5 // pred_check
        _
      $region62: #{style_embedding_forward.1} parent=5 // pred_check_branch
        %381 = sbr.rel (%p378) target = $region64
      $region63: #{style_embedding_forward.1} parent=5 // pred_region
        %s382 = ssub.s32 %s20, 1
        // Predicated region
        $region65: #{style_embedding_forward.1} parent=63 // pred_check
          %p383 = pneg %p109
        $region66: #{style_embedding_forward.1} parent=63 // pred_check_branch
          %385 = sbr.rel (%p383) target = $region68
        $region67: #{style_embedding_forward.1} parent=63 // pred_region
          %386 = dma.done [#allocation3], 2048
        $region68: #{style_embedding_forward.1} parent=63 // pred_fallthru
          _
        %s387 = smul.u32 2, %s25
        %p388 = scmp.lt.s32.totalorder %s387, 3
        %s389 = scalar_select %p388, %s387, 3
        %s390 = smul.addr %s389, 4
        %s391 = scalar_lea.vmem %s0, %s390
        %p392 = pneg %p46
        %p393 = pneg %p43
        %p394 = pneg %p67
        %p395 = pneg %p64
        %p396 = pneg %p88
        %p397 = pneg %p85
        %p398 = pneg %p109
        %p399 = pneg %p106
        %p400 = pneg %p130
        %p401 = pneg %p127
        %p402 = pneg %p151
        %p403 = pneg %p148
        %p404 = pneg %p172
        %p405 = pneg %p169
        %p406 = pneg %p193
        %p407 = pneg %p190
        %p408 = pneg %p214
        %p409 = pneg %p211
        %p410 = pneg %p235
        %p411 = pneg %p232
        %p412 = pneg %p256
        %p413 = pneg %p253
        %p414 = pneg %p282
        %p415 = pneg %p279
        %s416 = smul.u32 2, %s25
        %p417 = scmp.lt.s32.totalorder %s416, 3
        %s418 = scalar_select %p417, %s416, 3
        %s419 = smul.addr %s418, 4
        %s420 = scalar_lea.vmem %s11, %s419
        %p421 = pneg %p308
        %p422 = pneg %p305
        %s423 = smul.u32 2, %s25
        %p424 = scmp.lt.s32.totalorder %s423, 3
        %s425 = scalar_select %p424, %s423, 3
        %s426 = smul.addr %s425, 4
        %s427 = scalar_lea.vmem %s12, %s426
        %s428 = smul.u32 2, %s25
        %p429 = scmp.lt.s32.totalorder %s428, 3
        %s430 = scalar_select %p429, %s428, 3
        %s431 = smul.addr %s430, 4
        %s432 = scalar_lea.vmem %s0, %s431
        %s433 = smul.u32 2, %s25
        %s434 = smul.u32 2, %s25
        %p435 = scmp.lt.s32.totalorder %s434, 3
        %s436 = scalar_select %p435, %s434, 3
        %s437 = smul.addr %s436, 4
        %s438 = scalar_lea.vmem %s11, %s437
        %s439 = smul.u32 2, %s25
        %s440 = smul.u32 2, %s25
        %p441 = scmp.lt.s32.totalorder %s440, 3
        %s442 = scalar_select %p441, %s440, 3
        %s443 = smul.addr %s442, 4
        %s444 = scalar_lea.vmem %s12, %s443
        %s445 = smul.u32 2, %s25
        %v447 = vld [vmem:[%s432] sm:$0xf]
        %v448 = vld [vmem:[%s432 + $0x4] sm:$0xf]
        %v449 = vld [vmem:[%s1] sm:$0xff]
        %v450 = vld [vmem:[%s1 + $0x8] sm:$0xff]
        %v451 = vld [vmem:[%s1 + $0x10] sm:$0xff]
        %v452 = vld [vmem:[%s1 + $0x18] sm:$0xff]
        %v453 = vld [vmem:[%s1 + $0x20] sm:$0xff]
        %v454 = vld [vmem:[%s1 + $0x28] sm:$0xff]
        %v455 = vld [vmem:[%s1 + $0x30] sm:$0xff]
        %v456 = vld [vmem:[%s1 + $0x38] sm:$0xff]
        %v457 = vld [vmem:[%s1 + $0x40] sm:$0xff]
        %v458 = vld [vmem:[%s1 + $0x48] sm:$0xff]
        %v459 = vld [vmem:[%s1 + $0x50] sm:$0xff]
        %v460 = vld [vmem:[%s1 + $0x58] sm:$0xff]
        %v461 = vld [vmem:[%s1 + $0x60] sm:$0xff]
        %v462 = vld [vmem:[%s1 + $0x68] sm:$0xff]
        %v463 = vld [vmem:[%s1 + $0x70] sm:$0xff]
        %v464 = vld [vmem:[%s1 + $0x78] sm:$0xff]
        %v465 = vld [vmem:[%s2] sm:$0x3]
        %v467 = vlaneseq
        %v468 = vshrl.u32 %v467, 7
        %v469 = vsub.s32 0, %v468
        %v470 = vrot.slane %v465, %v469
        %v471 = vlaneseq
        %v472 = vshrl.u32 %v471, 7
        %v473 = vsub.s32 1, %v472
        %v474 = vrot.slane %v465, %v473
        %v479 = vunpack.c.l.b16 %v447
        %v480 = vunpack.c.l.b16 %v448
        %v481 = vpack.c.b16 %v480, %v479
        %v499 = vunpack.c.l.b16 %v449
        %v500 = vunpack.c.h.b16 %v449
        %v501 = vunpack.c.l.b16 %v450
        %v502 = vunpack.c.h.b16 %v450
        %v503 = vunpack.c.l.b16 %v451
        %v504 = vunpack.c.h.b16 %v451
        %v505 = vunpack.c.l.b16 %v452
        %v506 = vunpack.c.h.b16 %v452
        %v507 = vunpack.c.l.b16 %v453
        %v508 = vunpack.c.h.b16 %v453
        %v509 = vunpack.c.l.b16 %v454
        %v510 = vunpack.c.h.b16 %v454
        %v511 = vunpack.c.l.b16 %v455
        %v512 = vunpack.c.h.b16 %v455
        %v513 = vunpack.c.l.b16 %v456
        %v514 = vunpack.c.h.b16 %v456
        %v515 = vunpack.c.l.b16 %v457
        %v516 = vunpack.c.h.b16 %v457
        %v517 = vunpack.c.l.b16 %v458
        %v518 = vunpack.c.h.b16 %v458
        %v519 = vunpack.c.l.b16 %v459
        %v520 = vunpack.c.h.b16 %v459
        %v521 = vunpack.c.l.b16 %v460
        %v522 = vunpack.c.h.b16 %v460
        %v523 = vunpack.c.l.b16 %v461
        %v524 = vunpack.c.h.b16 %v461
        %v525 = vunpack.c.l.b16 %v462
        %v526 = vunpack.c.h.b16 %v462
        %v527 = vunpack.c.l.b16 %v463
        %v528 = vunpack.c.h.b16 %v463
        %v529 = vunpack.c.l.b16 %v464
        %v530 = vunpack.c.h.b16 %v464
        %v531 = vpack.c.b16 %v501, %v499
        %v532 = vpack.c.b16 %v502, %v500
        %v533 = vpack.c.b16 %v505, %v503
        %v534 = vpack.c.b16 %v506, %v504
        %v535 = vpack.c.b16 %v509, %v507
        %v536 = vpack.c.b16 %v510, %v508
        %v537 = vpack.c.b16 %v513, %v511
        %v538 = vpack.c.b16 %v514, %v512
        %v539 = vpack.c.b16 %v517, %v515
        %v540 = vpack.c.b16 %v518, %v516
        %v541 = vpack.c.b16 %v521, %v519
        %v542 = vpack.c.b16 %v522, %v520
        %v543 = vpack.c.b16 %v525, %v523
        %v544 = vpack.c.b16 %v526, %v524
        %v545 = vpack.c.b16 %v529, %v527
        %v546 = vpack.c.b16 %v530, %v528
        %563 = vmatprep.subr.bf16.mxu0 %v546
        %564 = vmatpush1.bf16.msra.mxu0 %v545
        %565 = vmatprep.subr.bf16.mxu0 %v544
        %566 = vmatpush1.bf16.msra.mxu0 %v543
        %567 = vmatprep.subr.bf16.mxu0 %v542
        %568 = vmatpush1.bf16.msra.mxu0 %v541
        %569 = vmatprep.subr.bf16.mxu0 %v540
        %570 = vmatpush1.bf16.msra.mxu0 %v539
        %571 = vmatprep.subr.bf16.mxu0 %v538
        %572 = vmatpush1.bf16.msra.mxu0 %v537
        %573 = vmatprep.subr.bf16.mxu0 %v536
        %574 = vmatpush1.bf16.msra.mxu0 %v535
        %575 = vmatprep.subr.bf16.mxu0 %v534
        %576 = vmatpush1.bf16.msra.mxu0 %v533
        %577 = vmatprep.subr.bf16.mxu0 %v532
        %578 = vmatpush1.bf16.msra.mxu0 %v531
        %579 = vmatprep.subr.bf16.mxu0 0
        %580 = vmatpush2.bf16.msra.mxu0 0
        %581 = vmatprep.subr.bf16.mxu0 0
        %582 = vmatpush2.bf16.msra.mxu0 0
        %583 = vmatprep.subr.bf16.mxu0 0
        %584 = vmatpush2.bf16.msra.mxu0 0
        %585 = vmatprep.subr.bf16.mxu0 0
        %586 = vmatpush2.bf16.msra.mxu0 0
        %587 = vmatprep.subr.bf16.mxu0 0
        %588 = vmatpush2.bf16.msra.mxu0 0
        %589 = vmatprep.subr.bf16.mxu0 0
        %590 = vmatpush2.bf16.msra.mxu0 0
        %591 = vmatprep.subr.bf16.mxu0 0
        %592 = vmatpush2.bf16.msra.mxu0 0
        %593 = vmatprep.subr.bf16.mxu0 0
        %594 = vmatpush2.bf16.msra.mxu0 0
        %595 = vmatprep.mubr.bf16.mxu0 0
        %596 = vmatmul.mubr.bf16.gmra.mxu0 %v481
        %v597 = vpop.f32.mrf.mxu0
        %v598 = vadd.f32 %v470, %v597
        %v599 = vpop.f32.mrf.mxu0
        %v600 = vadd.f32 %v474, %v599
        %v601 = vpop.f32.mrf.mxu0
        %v602 = vadd.f32 %v470, %v601
        %v603 = vpop.f32.mrf.mxu0
        %v604 = vadd.f32 %v474, %v603
        %605 = vdwg.mxu0
        %v606 = vmax.f32 %v598, 0.0
        %v607 = vmax.f32 %v600, 0.0
        %v608 = vmax.f32 %v602, 0.0
        %v609 = vmax.f32 %v604, 0.0
        %v610 = vpack.c.bf16 %v608, %v606
        %v611 = vpack.c.bf16 %v609, %v607
        %v612 = vld [vmem:[#allocation2] sm:$0xf]
        %v613 = vld [vmem:[#allocation2 + $0x4] sm:$0xf]
        %v614 = vld [vmem:[#allocation2 + $0x8] sm:$0xf]
        %v615 = vld [vmem:[#allocation2 + $0xc] sm:$0xf]
        %v616 = vld [vmem:[#allocation2 + $0x10] sm:$0xf]
        %v617 = vld [vmem:[#allocation2 + $0x14] sm:$0xf]
        %v618 = vld [vmem:[#allocation2 + $0x18] sm:$0xf]
        %v619 = vld [vmem:[#allocation2 + $0x1c] sm:$0xf]
        %v620 = vld [vmem:[#allocation2 + $0x20] sm:$0xf]
        %v621 = vld [vmem:[#allocation2 + $0x24] sm:$0xf]
        %v622 = vld [vmem:[#allocation2 + $0x28] sm:$0xf]
        %v623 = vld [vmem:[#allocation2 + $0x2c] sm:$0xf]
        %v624 = vld [vmem:[#allocation2 + $0x30] sm:$0xf]
        %v625 = vld [vmem:[#allocation2 + $0x34] sm:$0xf]
        %v626 = vld [vmem:[#allocation2 + $0x38] sm:$0xf]
        %v627 = vld [vmem:[#allocation2 + $0x3c] sm:$0xf]
        %v628 = vld [vmem:[#allocation2 + $0x40] sm:$0xf]
        %v629 = vld [vmem:[#allocation2 + $0x44] sm:$0xf]
        %v630 = vld [vmem:[#allocation2 + $0x48] sm:$0xf]
        %v631 = vld [vmem:[#allocation2 + $0x4c] sm:$0xf]
        %v632 = vld [vmem:[#allocation2 + $0x50] sm:$0xf]
        %v633 = vld [vmem:[#allocation2 + $0x54] sm:$0xf]
        %v634 = vld [vmem:[#allocation2 + $0x58] sm:$0xf]
        %v635 = vld [vmem:[#allocation2 + $0x5c] sm:$0xf]
        %v636 = vld [vmem:[#allocation2 + $0x60] sm:$0xf]
        %v637 = vld [vmem:[#allocation2 + $0x64] sm:$0xf]
        %v638 = vld [vmem:[#allocation2 + $0x68] sm:$0xf]
        %v639 = vld [vmem:[#allocation2 + $0x6c] sm:$0xf]
        %v640 = vld [vmem:[#allocation2 + $0x70] sm:$0xf]
        %v641 = vld [vmem:[#allocation2 + $0x74] sm:$0xf]
        %v642 = vld [vmem:[#allocation2 + $0x78] sm:$0xf]
        %v643 = vld [vmem:[#allocation2 + $0x7c] sm:$0xf]
        %v644 = vld [vmem:[%s4] sm:$0x1]
        %v646 = vlaneseq
        %v647 = vshrl.u32 %v646, 7
        %v648 = vsub.s32 0, %v647
        %v649 = vrot.slane %v644, %v648
        %v683 = vunpack.c.l.b16 %v612
        %v684 = vunpack.c.l.b16 %v613
        %v685 = vunpack.c.l.b16 %v614
        %v686 = vunpack.c.l.b16 %v615
        %v687 = vunpack.c.l.b16 %v616
        %v688 = vunpack.c.l.b16 %v617
        %v689 = vunpack.c.l.b16 %v618
        %v690 = vunpack.c.l.b16 %v619
        %v691 = vunpack.c.l.b16 %v620
        %v692 = vunpack.c.l.b16 %v621
        %v693 = vunpack.c.l.b16 %v622
        %v694 = vunpack.c.l.b16 %v623
        %v695 = vunpack.c.l.b16 %v624
        %v696 = vunpack.c.l.b16 %v625
        %v697 = vunpack.c.l.b16 %v626
        %v698 = vunpack.c.l.b16 %v627
        %v699 = vunpack.c.l.b16 %v628
        %v700 = vunpack.c.l.b16 %v629
        %v701 = vunpack.c.l.b16 %v630
        %v702 = vunpack.c.l.b16 %v631
        %v703 = vunpack.c.l.b16 %v632
        %v704 = vunpack.c.l.b16 %v633
        %v705 = vunpack.c.l.b16 %v634
        %v706 = vunpack.c.l.b16 %v635
        %v707 = vunpack.c.l.b16 %v636
        %v708 = vunpack.c.l.b16 %v637
        %v709 = vunpack.c.l.b16 %v638
        %v710 = vunpack.c.l.b16 %v639
        %v711 = vunpack.c.l.b16 %v640
        %v712 = vunpack.c.l.b16 %v641
        %v713 = vunpack.c.l.b16 %v642
        %v714 = vunpack.c.l.b16 %v643
        %v715 = vpack.c.b16 %v684, %v683
        %v716 = vpack.c.b16 %v686, %v685
        %v717 = vpack.c.b16 %v688, %v687
        %v718 = vpack.c.b16 %v690, %v689
        %v719 = vpack.c.b16 %v692, %v691
        %v720 = vpack.c.b16 %v694, %v693
        %v721 = vpack.c.b16 %v696, %v695
        %v722 = vpack.c.b16 %v698, %v697
        %v723 = vpack.c.b16 %v700, %v699
        %v724 = vpack.c.b16 %v702, %v701
        %v725 = vpack.c.b16 %v704, %v703
        %v726 = vpack.c.b16 %v706, %v705
        %v727 = vpack.c.b16 %v708, %v707
        %v728 = vpack.c.b16 %v710, %v709
        %v729 = vpack.c.b16 %v712, %v711
        %v730 = vpack.c.b16 %v714, %v713
        %747 = vmatprep.subr.bf16.mxu0 0
        %748 = vmatpush1.bf16.msra.mxu0 %v722
        %749 = vmatprep.subr.bf16.mxu0 0
        %750 = vmatpush1.bf16.msra.mxu0 %v721
        %751 = vmatprep.subr.bf16.mxu0 0
        %752 = vmatpush1.bf16.msra.mxu0 %v720
        %753 = vmatprep.subr.bf16.mxu0 0
        %754 = vmatpush1.bf16.msra.mxu0 %v719
        %755 = vmatprep.subr.bf16.mxu0 0
        %756 = vmatpush1.bf16.msra.mxu0 %v718
        %757 = vmatprep.subr.bf16.mxu0 0
        %758 = vmatpush1.bf16.msra.mxu0 %v717
        %759 = vmatprep.subr.bf16.mxu0 0
        %760 = vmatpush1.bf16.msra.mxu0 %v716
        %761 = vmatprep.subr.bf16.mxu0 0
        %762 = vmatpush1.bf16.msra.mxu0 %v715
        %763 = vmatprep.subr.bf16.mxu0 0
        %764 = vmatpush2.bf16.msra.mxu0 %v730
        %765 = vmatprep.subr.bf16.mxu0 0
        %766 = vmatpush2.bf16.msra.mxu0 %v729
        %767 = vmatprep.subr.bf16.mxu0 0
        %768 = vmatpush2.bf16.msra.mxu0 %v728
        %769 = vmatprep.subr.bf16.mxu0 0
        %770 = vmatpush2.bf16.msra.mxu0 %v727
        %771 = vmatprep.subr.bf16.mxu0 0
        %772 = vmatpush2.bf16.msra.mxu0 %v726
        %773 = vmatprep.subr.bf16.mxu0 0
        %774 = vmatpush2.bf16.msra.mxu0 %v725
        %775 = vmatprep.subr.bf16.mxu0 0
        %776 = vmatpush2.bf16.msra.mxu0 %v724
        %777 = vmatprep.subr.bf16.mxu0 0
        %778 = vmatpush2.bf16.msra.mxu0 %v723
        %779 = vmatprep.mubr.bf16.mxu0 %v611
        %780 = vmatmul.mubr.bf16.gmra.mxu0 %v610
        %v781 = vpop.f32.mrf.mxu0
        %v782 = vadd.f32 %v649, %v781
        %v783 = vpop.f32.mrf.mxu0
        %v784 = vpop.f32.mrf.mxu0
        %v785 = vadd.f32 %v649, %v784
        %v786 = vpop.f32.mrf.mxu0
        %787 = vdwg.mxu0
        %788 = vadd.xlane.f32.xlu0 %v782
        %v789 = vpop.xlane.xlu0 %788
        %790 = vadd.xlane.f32.xlu0 %v785
        %v791 = vpop.xlane.xlu0 %790
        %v792 = vrcp.pop 128.0
        %v793 = vmul.f32 %v789, %v792
        %v794 = vmul.f32 %v791, %v792
        %v795 = vsub.f32 %v782, %v793
        %v796 = vsub.f32 %v785, %v794
        %v797 = vmul.f32 %v795, %v795
        %v798 = vmul.f32 %v796, %v796
        %799 = vadd.xlane.f32.xlu0 %v797
        %v800 = vpop.xlane.xlu0 %799
        %801 = vadd.xlane.f32.xlu0 %v798
        %v802 = vpop.xlane.xlu0 %801
        %v803 = vmul.f32 %v800, %v792
        %v804 = vmul.f32 %v802, %v792
        %v805 = vadd.f32 %v803, 1e-05
        %v806 = vadd.f32 %v804, 1e-05
        %v807 = vrsqrt.pop %v805
        %v808 = vrsqrt.pop %v806
        %v809 = vmul.f32 %v795, %v807
        %v810 = vmul.f32 %v796, %v808
        %v811 = vld [vmem:[%s5] sm:$0x1]
        %v813 = vlaneseq
        %v814 = vshrl.u32 %v813, 7
        %v815 = vsub.s32 0, %v814
        %v816 = vrot.slane %v811, %v815
        %v818 = vmul.f32 %v809, %v816
        %v819 = vmul.f32 %v810, %v816
        %v820 = vld [vmem:[%s6] sm:$0x1]
        %v822 = vlaneseq
        %v823 = vshrl.u32 %v822, 7
        %v824 = vsub.s32 0, %v823
        %v825 = vrot.slane %v820, %v824
        %v827 = vadd.f32 %v818, %v825
        %v828 = vadd.f32 %v819, %v825
        %v829 = vpack.c.bf16 %v828, %v827
        %v831 = vunpack.c.l.b16 %v829
        %v832 = vunpack.c.h.b16 %v829
        %v833 = vpack.c.b16 %v831, %v831
        %v834 = vpack.c.b16 %v832, %v832
        %837 = vst [vmem:[%s438] sm:$0xf] %v833
        %838 = vst [vmem:[%s438 + $0x4] sm:$0xf] %v834
        %v839 = vld [vmem:[%s7] sm:$0xf]
        %v840 = vld [vmem:[%s7 + $0x4] sm:$0xf]
        %v841 = vld [vmem:[%s7 + $0x8] sm:$0xf]
        %v842 = vld [vmem:[%s7 + $0xc] sm:$0xf]
        %v843 = vld [vmem:[%s7 + $0x10] sm:$0xf]
        %v844 = vld [vmem:[%s7 + $0x14] sm:$0xf]
        %v845 = vld [vmem:[%s7 + $0x18] sm:$0xf]
        %v846 = vld [vmem:[%s7 + $0x1c] sm:$0xf]
        %v847 = vld [vmem:[%s7 + $0x20] sm:$0xf]
        %v848 = vld [vmem:[%s7 + $0x24] sm:$0xf]
        %v849 = vld [vmem:[%s7 + $0x28] sm:$0xf]
        %v850 = vld [vmem:[%s7 + $0x2c] sm:$0xf]
        %v851 = vld [vmem:[%s7 + $0x30] sm:$0xf]
        %v852 = vld [vmem:[%s7 + $0x34] sm:$0xf]
        %v853 = vld [vmem:[%s7 + $0x38] sm:$0xf]
        %v854 = vld [vmem:[%s7 + $0x3c] sm:$0xf]
        %v855 = vld [vmem:[%s8] sm:$0x1]
        %v857 = vlaneseq
        %v858 = vshrl.u32 %v857, 7
        %v859 = vsub.s32 0, %v858
        %v860 = vrot.slane %v855, %v859
        %v878 = vunpack.c.l.b16 %v839
        %v879 = vunpack.c.l.b16 %v840
        %v880 = vunpack.c.l.b16 %v841
        %v881 = vunpack.c.l.b16 %v842
        %v882 = vunpack.c.l.b16 %v843
        %v883 = vunpack.c.l.b16 %v844
        %v884 = vunpack.c.l.b16 %v845
        %v885 = vunpack.c.l.b16 %v846
        %v886 = vunpack.c.l.b16 %v847
        %v887 = vunpack.c.l.b16 %v848
        %v888 = vunpack.c.l.b16 %v849
        %v889 = vunpack.c.l.b16 %v850
        %v890 = vunpack.c.l.b16 %v851
        %v891 = vunpack.c.l.b16 %v852
        %v892 = vunpack.c.l.b16 %v853
        %v893 = vunpack.c.l.b16 %v854
        %v894 = vpack.c.b16 %v879, %v878
        %v895 = vpack.c.b16 %v881, %v880
        %v896 = vpack.c.b16 %v883, %v882
        %v897 = vpack.c.b16 %v885, %v884
        %v898 = vpack.c.b16 %v887, %v886
        %v899 = vpack.c.b16 %v889, %v888
        %v900 = vpack.c.b16 %v891, %v890
        %v901 = vpack.c.b16 %v893, %v892
        %910 = vmatprep.subr.bf16.mxu0 0
        %911 = vmatpush1.bf16.msra.mxu0 %v901
        %912 = vmatprep.subr.bf16.mxu0 0
        %913 = vmatpush1.bf16.msra.mxu0 %v900
        %914 = vmatprep.subr.bf16.mxu0 0
        %915 = vmatpush1.bf16.msra.mxu0 %v899
        %916 = vmatprep.subr.bf16.mxu0 0
        %917 = vmatpush1.bf16.msra.mxu0 %v898
        %918 = vmatprep.subr.bf16.mxu0 0
        %919 = vmatpush1.bf16.msra.mxu0 %v897
        %920 = vmatprep.subr.bf16.mxu0 0
        %921 = vmatpush1.bf16.msra.mxu0 %v896
        %922 = vmatprep.subr.bf16.mxu0 0
        %923 = vmatpush1.bf16.msra.mxu0 %v895
        %924 = vmatprep.subr.bf16.mxu0 0
        %925 = vmatpush1.bf16.msra.mxu0 %v894
        %926 = vmatprep.subr.bf16.mxu0 0
        %927 = vmatpush2.bf16.msra.mxu0 0
        %928 = vmatprep.subr.bf16.mxu0 0
        %929 = vmatpush2.bf16.msra.mxu0 0
        %930 = vmatprep.subr.bf16.mxu0 0
        %931 = vmatpush2.bf16.msra.mxu0 0
        %932 = vmatprep.subr.bf16.mxu0 0
        %933 = vmatpush2.bf16.msra.mxu0 0
        %934 = vmatprep.subr.bf16.mxu0 0
        %935 = vmatpush2.bf16.msra.mxu0 0
        %936 = vmatprep.subr.bf16.mxu0 0
        %937 = vmatpush2.bf16.msra.mxu0 0
        %938 = vmatprep.subr.bf16.mxu0 0
        %939 = vmatpush2.bf16.msra.mxu0 0
        %940 = vmatprep.subr.bf16.mxu0 0
        %941 = vmatpush2.bf16.msra.mxu0 0
        %942 = vmatprep.mubr.bf16.mxu0 0
        %943 = vmatmul.mubr.bf16.gmra.mxu0 %v829
        %v944 = vpop.f32.mrf.mxu0
        %v945 = vadd.f32 %v860, %v944
        %v946 = vpop.f32.mrf.mxu0
        %v947 = vpop.f32.mrf.mxu0
        %v948 = vadd.f32 %v860, %v947
        %v949 = vpop.f32.mrf.mxu0
        %950 = vdwg.mxu0
        %v951 = vmax.f32 %v945, 0.0
        %v952 = vmax.f32 %v948, 0.0
        %v953 = vpack.c.bf16 %v952, %v951
        %v954 = vld [vmem:[%s9] sm:$0xf]
        %v955 = vld [vmem:[%s9 + $0x4] sm:$0xf]
        %v956 = vld [vmem:[%s9 + $0x8] sm:$0xf]
        %v957 = vld [vmem:[%s9 + $0xc] sm:$0xf]
        %v958 = vld [vmem:[%s9 + $0x10] sm:$0xf]
        %v959 = vld [vmem:[%s9 + $0x14] sm:$0xf]
        %v960 = vld [vmem:[%s9 + $0x18] sm:$0xf]
        %v961 = vld [vmem:[%s9 + $0x1c] sm:$0xf]
        %v962 = vld [vmem:[%s10] sm:$0x1]
        %v964 = vlaneseq
        %v965 = vshrl.u32 %v964, 7
        %v966 = vsub.s32 0, %v965
        %v967 = vrot.slane %v962, %v966
        %v977 = vunpack.c.l.b16 %v954
        %v978 = vunpack.c.l.b16 %v955
        %v979 = vunpack.c.l.b16 %v956
        %v980 = vunpack.c.l.b16 %v957
        %v981 = vunpack.c.l.b16 %v958
        %v982 = vunpack.c.l.b16 %v959
        %v983 = vunpack.c.l.b16 %v960
        %v984 = vunpack.c.l.b16 %v961
        %v985 = vpack.c.b16 %v978, %v977
        %v986 = vpack.c.b16 %v980, %v979
        %v987 = vpack.c.b16 %v982, %v981
        %v988 = vpack.c.b16 %v984, %v983
        %vm993 = vcmask 523264
        %v995 = vsel %vm993, %v953, 0
        %997 = vmatprep.subr.bf16.mxu0 0
        %998 = vmatpush1.bf16.msra.mxu0 0
        %999 = vmatprep.subr.bf16.mxu0 0
        %1000 = vmatpush1.bf16.msra.mxu0 0
        %1001 = vmatprep.subr.bf16.mxu0 0
        %1002 = vmatpush1.bf16.msra.mxu0 0
        %1003 = vmatprep.subr.bf16.mxu0 0
        %1004 = vmatpush1.bf16.msra.mxu0 0
        %1005 = vmatprep.subr.bf16.mxu0 0
        %1006 = vmatpush1.bf16.msra.mxu0 %v988
        %1007 = vmatprep.subr.bf16.mxu0 0
        %1008 = vmatpush1.bf16.msra.mxu0 %v987
        %1009 = vmatprep.subr.bf16.mxu0 0
        %1010 = vmatpush1.bf16.msra.mxu0 %v986
        %1011 = vmatprep.subr.bf16.mxu0 0
        %1012 = vmatpush1.bf16.msra.mxu0 %v985
        %1013 = vmatprep.subr.bf16.mxu0 0
        %1014 = vmatpush2.bf16.msra.mxu0 0
        %1015 = vmatprep.subr.bf16.mxu0 0
        %1016 = vmatpush2.bf16.msra.mxu0 0
        %1017 = vmatprep.subr.bf16.mxu0 0
        %1018 = vmatpush2.bf16.msra.mxu0 0
        %1019 = vmatprep.subr.bf16.mxu0 0
        %1020 = vmatpush2.bf16.msra.mxu0 0
        %1021 = vmatprep.subr.bf16.mxu0 0
        %1022 = vmatpush2.bf16.msra.mxu0 0
        %1023 = vmatprep.subr.bf16.mxu0 0
        %1024 = vmatpush2.bf16.msra.mxu0 0
        %1025 = vmatprep.subr.bf16.mxu0 0
        %1026 = vmatpush2.bf16.msra.mxu0 0
        %1027 = vmatprep.subr.bf16.mxu0 0
        %1028 = vmatpush2.bf16.msra.mxu0 0
        %1029 = vmatprep.mubr.bf16.mxu0 0
        %1030 = vmatmul.mubr.bf16.gmra.mxu0 %v995
        %v1031 = vpop.f32.mrf.mxu0
        %v1032 = vadd.f32 %v967, %v1031
        %v1033 = vpop.f32.mrf.mxu0
        %v1034 = vpop.f32.mrf.mxu0
        %v1035 = vadd.f32 %v967, %v1034
        %v1036 = vpop.f32.mrf.mxu0
        %1037 = vdwg.mxu0
        %v1038 = vpack.c.bf16 %v1035, %v1032
        %v1040 = vunpack.c.l.b16 %v1038
        %v1041 = vunpack.c.h.b16 %v1038
        %v1042 = vpack.c.b16 %v1040, %v1040
        %v1043 = vpack.c.b16 %v1041, %v1041
        %1046 = vst [vmem:[%s444] sm:$0xf] %v1042
        %1047 = vst [vmem:[%s444 + $0x4] sm:$0xf] %v1043
        %s1048 = smul.u32 2, %s25
        %p1049 = scmp.lt.s32.totalorder %s1048, 3
        %s1050 = scalar_select %p1049, %s1048, 3
        %s1051 = smul.addr %s1050, 4
        %s1052 = scalar_lea.vmem %s11, %s1051
        %s1053 = smul.u32 2, %s25
        %p1054 = scmp.lt.s32.totalorder %s1053, 3
        %s1055 = scalar_select %p1054, %s1053, 3
        %s1056 = smul.addr %s1055, 4
        %s1057 = scalar_lea.vmem %s12, %s1056
        // Predicated region
        $region69: #{style_embedding_forward.1} parent=63 // pred_check
          %p1058 = pneg %p279
        $region70: #{style_embedding_forward.1} parent=63 // pred_check_branch
          %1060 = sbr.rel (%p1058) target = $region72
        $region71: #{style_embedding_forward.1} parent=63 // pred_region
          %s1061 = smul.u32 2, %s25
        $region72: #{style_embedding_forward.1} parent=63 // pred_fallthru
          _
        // Predicated region
        $region73: #{style_embedding_forward.1} parent=63 // pred_check
          %p1062 = pneg %p305
        $region74: #{style_embedding_forward.1} parent=63 // pred_check_branch
          %1064 = sbr.rel (%p1062) target = $region76
        $region75: #{style_embedding_forward.1} parent=63 // pred_region
          %s1065 = smul.u32 2, %s25
        $region76: #{style_embedding_forward.1} parent=63 // pred_fallthru
          _
      $region64: #{style_embedding_forward.1} parent=5 // pred_fallthru
        _
      %p1066 = scmp.le.s32.totalorder 2, %s20
      // Predicated region
      $region77: #{style_embedding_forward.1} parent=5 // pred_check
        %p1067 = pneg %p1066
      $region78: #{style_embedding_forward.1} parent=5 // pred_check_branch
        %1069 = sbr.rel (%p1067) target = $region80
      $region79: #{style_embedding_forward.1} parent=5 // pred_region
        %s1070 = ssub.s32 %s20, 2
        // Predicated region
        $region81: #{style_embedding_forward.1} parent=79 // pred_check
          %p1071 = pneg %p285
        $region82: #{style_embedding_forward.1} parent=79 // pred_check_branch
          %1073 = sbr.rel (%p1071) target = $region84
        $region83: #{style_embedding_forward.1} parent=79 // pred_region
          %s1074 = smul.u32 2, %s26
          %p1075 = scmp.lt.s32.totalorder %s1074, 3
          %s1076 = scalar_select %p1075, %s1074, 3
          %s1077 = smul.addr %s1076, 4
          %s1078 = scalar_lea.vmem %s11, %s1077
        $region84: #{style_embedding_forward.1} parent=79 // pred_fallthru
          _
        // Predicated region
        $region85: #{style_embedding_forward.1} parent=79 // pred_check
          %p1079 = pneg %p311
        $region86: #{style_embedding_forward.1} parent=79 // pred_check_branch
          %1081 = sbr.rel (%p1079) target = $region88
        $region87: #{style_embedding_forward.1} parent=79 // pred_region
          %s1082 = smul.u32 2, %s26
          %p1083 = scmp.lt.s32.totalorder %s1082, 3
          %s1084 = scalar_select %p1083, %s1082, 3
          %s1085 = smul.addr %s1084, 4
          %s1086 = scalar_lea.vmem %s12, %s1085
        $region88: #{style_embedding_forward.1} parent=79 // pred_fallthru
          _
      $region80: #{style_embedding_forward.1} parent=5 // pred_fallthru
        _
    $region6: #{style_embedding_forward.1} parent=1 // loop_footer
      %s24 = sadd.s32 1, %s20
    $region7: #{style_embedding_forward.1} parent=1 // loop_footer_branch
      %19 = sbr.rel target = $region3
    $region8: #{style_embedding_forward.1} parent=1 // loop_exit
      _
    %1087 = vsyncpa [#allocation3], 1
    %s1088 = scalar_lea.sflag [#allocation3], 1
    %1089 = vsyncpa %s1088, 1

</llo_original>
